<compile_context>
chip_gen: v6e
topology: v6e:2x2x1
jax: 0.10.0
libtpu: 0.0.40
codegen_flags: <defaults>
</compile_context>

<pallas_src>
import functools

import jax
import jax.numpy as jnp
from jax import lax
from jax.experimental import pallas as pl
from jax.experimental.pallas import tpu as pltpu


def _round_up(x, m):
    return ((x + m - 1) // m) * m


# ---------------------------------------------------------------------------
# Kernel (feature-major: activations are [features, batch_tile])
# ---------------------------------------------------------------------------
def actor_kernel(x_ref, w1_ref, b1_ref, w2_ref, b2_ref, wh_ref, bh_ref,
                 out_ref, *, action_dim, compute_dtype):
    # Matmul operands in compute_dtype (f32 or bf16); accumulate in f32.
    x = x_ref[...].astype(compute_dtype)                            # [S, TB]

    # fc1 + relu (epilogue in f32)
    h1 = jnp.dot(w1_ref[...], x, preferred_element_type=jnp.float32)
    h1 = jnp.maximum(h1 + b1_ref[...], 0.0)                         # [H, TB]

    # fc2 + relu
    h2 = jnp.dot(w2_ref[...], h1.astype(compute_dtype),
                 preferred_element_type=jnp.float32)
    h2 = jnp.maximum(h2 + b2_ref[...], 0.0)                         # [H, TB]

    # fused heads: rows [0, A) = mu head, rows [A, 2A) = sigma head
    z = jnp.dot(wh_ref[...], h2.astype(compute_dtype),
                preferred_element_type=jnp.float32)
    z = z + bh_ref[...]                                             # [P, TB]

    mu = jnp.tanh(z)
    # stable softplus: max(x, 0) + log1p(exp(-|x|))
    sp = jnp.maximum(z, 0.0) + jnp.log1p(jnp.exp(-jnp.abs(z))) + 1e-4

    row = lax.broadcasted_iota(jnp.int32, z.shape, 0)
    out_ref[...] = jnp.where(row < action_dim, mu, sp).astype(out_ref.dtype)


# ---------------------------------------------------------------------------
# Host-side parameter packing (feature-major + head fusion + sublane padding)
# ---------------------------------------------------------------------------
def pack_params(params, compute_dtype=jnp.float32, sublane=8):
    """Repack [in, out] weights into feature-major [out_pad, in_pad] layouts,
    fuse mu/sigma heads into one [P, H_pad] weight (P = round_up(2A, 8)),
    zero-pad the hidden dim to a sublane multiple, and cast matmul weights to
    compute_dtype (biases stay f32 for the f32 epilogue)."""
    w1, w2 = params["w1"], params["w2"]          # [S, H], [H, H]
    b1, b2 = params["b1"], params["b2"]          # [1, H]
    wmu, wsig = params["wmu"], params["wsig"]    # [H, A]
    bmu, bsig = params["bmu"], params["bsig"]    # [1, A]

    S, H = w1.shape
    A = wmu.shape[1]
    Hp = _round_up(H, sublane)
    P = _round_up(2 * A, sublane)

    w1_t = jnp.zeros((Hp, S), jnp.float32).at[:H, :].set(w1.T)
    b1_t = jnp.zeros((Hp, 1), jnp.float32).at[:H, 0].set(b1[0])
    w2_t = jnp.zeros((Hp, Hp), jnp.float32).at[:H, :H].set(w2.T)
    b2_t = jnp.zeros((Hp, 1), jnp.float32).at[:H, 0].set(b2[0])

    wh = jnp.zeros((P, Hp), jnp.float32)
    wh = wh.at[:A, :H].set(wmu.T).at[A:2 * A, :H].set(wsig.T)
    bh = jnp.zeros((P, 1), jnp.float32)
    bh = bh.at[:A, 0].set(bmu[0]).at[A:2 * A, 0].set(bsig[0])

    return {
        "w1": w1_t.astype(compute_dtype), "b1": b1_t,
        "w2": w2_t.astype(compute_dtype), "b2": b2_t,
        "wh": wh.astype(compute_dtype), "bh": bh,
    }


# ---------------------------------------------------------------------------
# Forward wrapper
# ---------------------------------------------------------------------------
def _actor_forward_impl(state, packed, action_dim, block_b=1024):
    B, S = state.shape
    Hp = packed["w1"].shape[0]
    P = packed["wh"].shape[0]
    compute_dtype = packed["w1"].dtype

    # Waste-free lane tiling of the batch axis: pick the number of tiles
    # first, then the smallest 128-aligned tile that covers them.  Keep at
    # least 2 grid steps for B >= 256 so both v7x TensorCores get work
    # ("parallel" is a no-op on single-TC v5e/v6e but costs ~0.35us there).
    num_tiles = pl.cdiv(B, block_b)
    if B >= 256:
        num_tiles = max(num_tiles, 2)
    TB = _round_up(pl.cdiv(B, num_tiles), 128)
    B_pad = num_tiles * TB

    # Feature-major input: [S, B_pad], batch on the lane axis.
    x_t = state.T
    if B_pad != B:
        x_t = jnp.pad(x_t, ((0, 0), (0, B_pad - B)))

    def nbytes(a):
        return a.size * a.dtype.itemsize

    weight_bytes = sum(nbytes(packed[k]) for k in
                       ("w1", "b1", "w2", "b2", "wh", "bh"))
    io_tile_bytes = TB * (S * state.dtype.itemsize + P * 4)
    interm_bytes = TB * (2 * Hp + 3 * P) * 4
    # Resident weights (x2 default buffering) + double-buffered i/o tiles +
    # f32 intermediates + headroom for Mosaic internal scratch.
    # TODO(synk): at large hidden_dim, single-buffer the constant-index weight
    # operands (pipeline_mode=pl.Buffered(1)) and drop the 2x on weight_bytes.
    vmem_limit = int(2 * weight_bytes + 2 * io_tile_bytes + interm_bytes
                     + (8 << 20))

    cost = pl.CostEstimate(
        flops=int(2 * B_pad * (S * Hp + Hp * Hp + Hp * P)),
        transcendentals=int(3 * B_pad * P),
        bytes_accessed=int(nbytes(x_t) + weight_bytes + B_pad * P * 4),
    )

    kernel = functools.partial(actor_kernel, action_dim=action_dim,
                               compute_dtype=compute_dtype)

    out = pl.pallas_call(
        kernel,
        out_shape=jax.ShapeDtypeStruct((P, B_pad), jnp.float32),
        grid=(num_tiles,),
        in_specs=[
            pl.BlockSpec((S, TB), lambda i: (0, i)),     # state^T tiled on lanes
            pl.BlockSpec((Hp, S), lambda i: (0, 0)),     # weights/biases resident
            pl.BlockSpec((Hp, 1), lambda i: (0, 0)),
            pl.BlockSpec((Hp, Hp), lambda i: (0, 0)),
            pl.BlockSpec((Hp, 1), lambda i: (0, 0)),
            pl.BlockSpec((P, Hp), lambda i: (0, 0)),
            pl.BlockSpec((P, 1), lambda i: (0, 0)),
        ],
        out_specs=pl.BlockSpec((P, TB), lambda i: (0, i)),
        compiler_params=pltpu.CompilerParams(
            dimension_semantics=("parallel",),
            vmem_limit_bytes=vmem_limit),
        cost_estimate=cost,
    )(x_t, packed["w1"], packed["b1"], packed["w2"], packed["b2"],
      packed["wh"], packed["bh"])

    mu = out[:action_dim, :B].T
    sigma = out[action_dim:2 * action_dim, :B].T
    return mu, sigma


actor_forward = jax.jit(_actor_forward_impl,
                        static_argnames=("action_dim", "block_b"))


# ---------------------------------------------------------------------------
# Init + reference
# ---------------------------------------------------------------------------
def init_params(key, state_dim, action_dim, hidden_dim):
    """Mirror the PyTorch module: weights ~ N(0,1) (nn.init.normal_),
    biases ~ U(-1/sqrt(fan_in), 1/sqrt(fan_in)) (Linear default).
    Weights stored as [in_features, out_features]."""
    ks = jax.random.split(key, 8)

    def w(k, fin, fout):
        return jax.random.normal(k, (fin, fout), jnp.float32)

    def b(k, fin, fout):
        bound = 1.0 / jnp.sqrt(fin)
        return jax.random.uniform(k, (1, fout), jnp.float32, -bound, bound)

    return {
        "w1":   w(ks[0], state_dim, hidden_dim),
        "b1":   b(ks[1], state_dim, hidden_dim),
        "w2":   w(ks[2], hidden_dim, hidden_dim),
        "b2":   b(ks[3], hidden_dim, hidden_dim),
        "wmu":  w(ks[4], hidden_dim, action_dim),
        "bmu":  b(ks[5], hidden_dim, action_dim),
        "wsig": w(ks[6], hidden_dim, action_dim),
        "bsig": b(ks[7], hidden_dim, action_dim),
    }


def reference_forward(state, p, compute_dtype=jnp.float32):
    def mm(x, w):
        return jnp.dot(x.astype(compute_dtype), w.astype(compute_dtype),
                       preferred_element_type=jnp.float32)
    h1 = jax.nn.relu(mm(state, p["w1"]) + p["b1"])
    h2 = jax.nn.relu(mm(h1, p["w2"]) + p["b2"])
    mu = jnp.tanh(mm(h2, p["wmu"]) + p["bmu"])
    sigma = jax.nn.softplus(mm(h2, p["wsig"]) + p["bsig"]) + 1e-4
    return mu, sigma


# ---------------------------------------------------------------------------
if __name__ == "__main__":
    key = jax.random.PRNGKey(0)
    k_param, k_state, k_state2 = jax.random.split(key, 3)

    batch, state_dim, action_dim, hidden_dim = 8, 16, 4, 32
    params = init_params(k_param, state_dim, action_dim, hidden_dim)
    state = jax.random.normal(k_state, (batch, state_dim), jnp.float32)

    # --- f32 path, single grid point: exact semantics check ---------------
    packed_f32 = pack_params(params, compute_dtype=jnp.float32)
    mu, sigma = actor_forward(state, packed_f32, action_dim)
    jax.block_until_ready((mu, sigma))

    mu_ref, sigma_ref = reference_forward(state, params)
    assert mu.shape == (batch, action_dim) and sigma.shape == (batch, action_dim)
    assert jnp.allclose(mu, mu_ref, atol=1e-4, rtol=1e-4)
    assert jnp.allclose(sigma, sigma_ref, atol=1e-4, rtol=1e-4)
    assert bool(jnp.all(sigma > 0.0))

    # --- multi-tile grid (batch lane tiling + padding) ----------------------
    batch2 = 300
    state2 = jax.random.normal(k_state2, (batch2, state_dim), jnp.float32)
    mu2, sigma2 = actor_forward(state2, packed_f32, action_dim, block_b=128)
    jax.block_until_ready((mu2, sigma2))
    mu2_ref, sigma2_ref = reference_forward(state2, params)
    assert mu2.shape == (batch2, action_dim)
    assert jnp.allclose(mu2, mu2_ref, atol=1e-4, rtol=1e-4)
    assert jnp.allclose(sigma2, sigma2_ref, atol=1e-4, rtol=1e-4)
    assert bool(jnp.all(sigma2 > 0.0))

    # --- bf16 matmul operands, f32 accumulation/epilogue --------------------
    packed_bf16 = pack_params(params, compute_dtype=jnp.bfloat16)
    mu_b, sigma_b = actor_forward(state, packed_bf16, action_dim)
    jax.block_until_ready((mu_b, sigma_b))
    mu_bref, sigma_bref = reference_forward(state, params,
                                            compute_dtype=jnp.bfloat16)
    assert jnp.allclose(mu_b, mu_bref, atol=2e-2, rtol=2e-2)
    assert jnp.allclose(sigma_b, sigma_bref, atol=2e-2, rtol=2e-2)
    assert bool(jnp.all(sigma_b > 0.0))

    print("KERNEL_OK")
</pallas_src>

<mosaic_0001>
module attributes {stable_mosaic.version = 11 : i64} {
  func.func @actor_kernel(%arg0: i32, %arg1: memref<16x128xf32, #tpu.memory_space<vmem>>, %arg2: memref<32x16xf32, #tpu.memory_space<vmem>>, %arg3: memref<32x1xf32, #tpu.memory_space<vmem>>, %arg4: memref<32x32xf32, #tpu.memory_space<vmem>>, %arg5: memref<32x1xf32, #tpu.memory_space<vmem>>, %arg6: memref<8x32xf32, #tpu.memory_space<vmem>>, %arg7: memref<8x1xf32, #tpu.memory_space<vmem>>, %arg8: memref<8x128xf32, #tpu.memory_space<vmem>>) attributes {dimension_semantics = [#tpu.dimension_semantics<parallel>], iteration_bounds = array<i64: 1>, scalar_prefetch = 0 : i64, scratch_operands = 0 : i64, tpu.core_type = #tpu.core_type<tc>, window_params = [{transform_indices = @transform_0, window_bounds = array<i64: 16, 128>}, {pipeline_mode = #tpu.pipeline_mode<synchronous>, transform_indices = @transform_1, window_bounds = array<i64: 32, 16>}, {pipeline_mode = #tpu.pipeline_mode<synchronous>, transform_indices = @transform_2, window_bounds = array<i64: 32, 1>}, {pipeline_mode = #tpu.pipeline_mode<synchronous>, transform_indices = @transform_3, window_bounds = array<i64: 32, 32>}, {pipeline_mode = #tpu.pipeline_mode<synchronous>, transform_indices = @transform_4, window_bounds = array<i64: 32, 1>}, {pipeline_mode = #tpu.pipeline_mode<synchronous>, transform_indices = @transform_5, window_bounds = array<i64: 8, 32>}, {pipeline_mode = #tpu.pipeline_mode<synchronous>, transform_indices = @transform_6, window_bounds = array<i64: 8, 1>}, {transform_indices = @transform_7, window_bounds = array<i64: 8, 128>}]} {
    %c0 = arith.constant 0 : index
    %c0_0 = arith.constant 0 : index
    %0 = vector.load %arg1[%c0, %c0_0] : memref<16x128xf32, #tpu.memory_space<vmem>>, vector<16x128xf32>
    %c0_1 = arith.constant 0 : index
    %c0_2 = arith.constant 0 : index
    %1 = vector.load %arg2[%c0_1, %c0_2] : memref<32x16xf32, #tpu.memory_space<vmem>>, vector<32x16xf32>
    %cst = arith.constant dense<0.000000e+00> : vector<32x128xf32>
    %2 = tpu.matmul %1, %0, %cst {dimension_numbers = #tpu.dot_dimension_numbers<[1], [0], [0], [1], [0, 0, 1, 1], [], []>} : vector<32x16xf32>, vector<16x128xf32>, vector<32x128xf32> -> vector<32x128xf32>
    %c0_3 = arith.constant 0 : index
    %c0_4 = arith.constant 0 : index
    %3 = vector.load %arg3[%c0_3, %c0_4] : memref<32x1xf32, #tpu.memory_space<vmem>>, vector<32x1xf32>
    %4 = vector.broadcast %3 : vector<32x1xf32> to vector<32x128xf32>
    %5 = arith.addf %2, %4 : vector<32x128xf32>
    %cst_5 = arith.constant 0.000000e+00 : f32
    %6 = vector.broadcast %cst_5 : f32 to vector<32x128xf32>
    %7 = arith.maximumf %5, %6 : vector<32x128xf32>
    %c0_6 = arith.constant 0 : index
    %c0_7 = arith.constant 0 : index
    %8 = vector.load %arg4[%c0_6, %c0_7] : memref<32x32xf32, #tpu.memory_space<vmem>>, vector<32x32xf32>
    %cst_8 = arith.constant dense<0.000000e+00> : vector<32x128xf32>
    %9 = tpu.matmul %8, %7, %cst_8 {dimension_numbers = #tpu.dot_dimension_numbers<[1], [0], [0], [1], [0, 0, 1, 1], [], []>} : vector<32x32xf32>, vector<32x128xf32>, vector<32x128xf32> -> vector<32x128xf32>
    %c0_9 = arith.constant 0 : index
    %c0_10 = arith.constant 0 : index
    %10 = vector.load %arg5[%c0_9, %c0_10] : memref<32x1xf32, #tpu.memory_space<vmem>>, vector<32x1xf32>
    %11 = vector.broadcast %10 : vector<32x1xf32> to vector<32x128xf32>
    %12 = arith.addf %9, %11 : vector<32x128xf32>
    %cst_11 = arith.constant 0.000000e+00 : f32
    %13 = vector.broadcast %cst_11 : f32 to vector<32x128xf32>
    %14 = arith.maximumf %12, %13 : vector<32x128xf32>
    %c0_12 = arith.constant 0 : index
    %c0_13 = arith.constant 0 : index
    %15 = vector.load %arg6[%c0_12, %c0_13] : memref<8x32xf32, #tpu.memory_space<vmem>>, vector<8x32xf32>
    %cst_14 = arith.constant dense<0.000000e+00> : vector<8x128xf32>
    %16 = tpu.matmul %15, %14, %cst_14 {dimension_numbers = #tpu.dot_dimension_numbers<[1], [0], [0], [1], [0, 0, 1, 1], [], []>} : vector<8x32xf32>, vector<32x128xf32>, vector<8x128xf32> -> vector<8x128xf32>
    %c0_15 = arith.constant 0 : index
    %c0_16 = arith.constant 0 : index
    %17 = vector.load %arg7[%c0_15, %c0_16] : memref<8x1xf32, #tpu.memory_space<vmem>>, vector<8x1xf32>
    %18 = vector.broadcast %17 : vector<8x1xf32> to vector<8x128xf32>
    %19 = arith.addf %16, %18 : vector<8x128xf32>
    %20 = math.tanh %19 : vector<8x128xf32>
    %cst_17 = arith.constant 0.000000e+00 : f32
    %21 = vector.broadcast %cst_17 : f32 to vector<8x128xf32>
    %22 = arith.maximumf %19, %21 : vector<8x128xf32>
    %23 = math.absf %19 : vector<8x128xf32>
    %cst_18 = arith.constant 0.000000e+00 : f32
    %24 = vector.broadcast %cst_18 : f32 to vector<8x128xf32>
    %25 = arith.subf %24, %23 : vector<8x128xf32>
    %26 = math.exp %25 : vector<8x128xf32>
    %27 = math.log1p %26 : vector<8x128xf32>
    %28 = arith.addf %22, %27 : vector<8x128xf32>
    %cst_19 = arith.constant 9.99999974E-5 : f32
    %29 = vector.broadcast %cst_19 : f32 to vector<8x128xf32>
    %30 = arith.addf %28, %29 : vector<8x128xf32>
    %31 = tpu.iota {dimensions = array<i32: 0>} : vector<8x128xi32>
    %c4_i32 = arith.constant 4 : i32
    %32 = vector.broadcast %c4_i32 : i32 to vector<8x128xi32>
    %33 = arith.cmpi slt, %31, %32 : vector<8x128xi32>
    %34 = arith.select %33, %20, %30 : vector<8x128xi1>, vector<8x128xf32>
    %c0_20 = arith.constant 0 : index
    %c0_21 = arith.constant 0 : index
    %35 = vector.load %arg8[%c0_20, %c0_21] : memref<8x128xf32, #tpu.memory_space<vmem>>, vector<8x128xf32>
    tpu.vector_store %arg8[%c0_20, %c0_21], %34 {strides = array<i32>} : memref<8x128xf32, #tpu.memory_space<vmem>>, vector<8x128xf32>,
    return
  }
  func.func @transform_0(%arg0: i32) -> (i32, i32) {
    %c0_i32 = arith.constant 0 : i32
    %c0_i32_0 = arith.constant 0 : i32
    return %c0_i32, %arg0 : i32, i32
  }
  func.func @transform_1(%arg0: i32) -> (i32, i32) {
    %c0_i32 = arith.constant 0 : i32
    %c0_i32_0 = arith.constant 0 : i32
    %c0_i32_1 = arith.constant 0 : i32
    return %c0_i32, %c0_i32_0 : i32, i32
  }
  func.func @transform_2(%arg0: i32) -> (i32, i32) {
    %c0_i32 = arith.constant 0 : i32
    %c0_i32_0 = arith.constant 0 : i32
    %c0_i32_1 = arith.constant 0 : i32
    return %c0_i32, %c0_i32_0 : i32, i32
  }
  func.func @transform_3(%arg0: i32) -> (i32, i32) {
    %c0_i32 = arith.constant 0 : i32
    %c0_i32_0 = arith.constant 0 : i32
    %c0_i32_1 = arith.constant 0 : i32
    return %c0_i32, %c0_i32_0 : i32, i32
  }
  func.func @transform_4(%arg0: i32) -> (i32, i32) {
    %c0_i32 = arith.constant 0 : i32
    %c0_i32_0 = arith.constant 0 : i32
    %c0_i32_1 = arith.constant 0 : i32
    return %c0_i32, %c0_i32_0 : i32, i32
  }
  func.func @transform_5(%arg0: i32) -> (i32, i32) {
    %c0_i32 = arith.constant 0 : i32
    %c0_i32_0 = arith.constant 0 : i32
    %c0_i32_1 = arith.constant 0 : i32
    return %c0_i32, %c0_i32_0 : i32, i32
  }
  func.func @transform_6(%arg0: i32) -> (i32, i32) {
    %c0_i32 = arith.constant 0 : i32
    %c0_i32_0 = arith.constant 0 : i32
    %c0_i32_1 = arith.constant 0 : i32
    return %c0_i32, %c0_i32_0 : i32, i32
  }
  func.func @transform_7(%arg0: i32) -> (i32, i32) {
    %c0_i32 = arith.constant 0 : i32
    %c0_i32_0 = arith.constant 0 : i32
    return %c0_i32, %arg0 : i32, i32
  }
}

</mosaic_0001>

<llo_original>
// kernel: _actor_forward_impl.1
$region0: #{_actor_forward_impl.1}
  #allocation0 [shape = 'u32[]', space=smem, size = 0x4, offset = 0x4, fixed_abs, tag = 'smem constant byte address 0x4 - core index']
  #allocation1 [shape = 'u32[144,128]{1,0:T(1,128)}', space=vmem, size = 0x12000, scoped, tag = 'internal scratch']
  %s0 = inlined_call_operand.vmem [shape: f32[16,128], index: 0, kind: input, shape index: {}]
  %s1 = inlined_call_operand.vmem [shape: f32[32,16], index: 1, kind: input, shape index: {}]
  %s2 = inlined_call_operand.vmem [shape: f32[32,1], index: 2, kind: input, shape index: {}]
  %s3 = inlined_call_operand.vmem [shape: f32[32,32], index: 3, kind: input, shape index: {}]
  %s4 = inlined_call_operand.vmem [shape: f32[32,1], index: 4, kind: input, shape index: {}]
  %s5 = inlined_call_operand.vmem [shape: f32[8,32], index: 5, kind: input, shape index: {}]
  %s6 = inlined_call_operand.vmem [shape: f32[8,1], index: 6, kind: input, shape index: {}]
  %s7 = inlined_call_operand.vmem [shape: f32[8,128], index: 7, kind: output, shape index: {}]
  %s8 = sld [smem:[#allocation0]]
  $region38: #{_actor_forward_impl.1} parent=0
    _
  %s10 = ssub.s32 1, %s8
  %s11 = scalar_select 0, %s10, %s8
  // Predicated region
  $region2: #{_actor_forward_impl.1} parent=0 // pred_check
    _
  $region3: #{_actor_forward_impl.1} parent=0 // pred_check_branch
    %13 = sbr.rel (0) target = $region5
  $region4: #{_actor_forward_impl.1} parent=0 // pred_region
    _
  $region5: #{_actor_forward_impl.1} parent=0 // pred_fallthru
    _
  // Predicated region
  $region6: #{_actor_forward_impl.1} parent=0 // pred_check
    _
  $region7: #{_actor_forward_impl.1} parent=0 // pred_check_branch
    %15 = sbr.rel (0) target = $region9
  $region8: #{_actor_forward_impl.1} parent=0 // pred_region
    _
  $region9: #{_actor_forward_impl.1} parent=0 // pred_fallthru
    _
  // Predicated region
  $region10: #{_actor_forward_impl.1} parent=0 // pred_check
    _
  $region11: #{_actor_forward_impl.1} parent=0 // pred_check_branch
    %17 = sbr.rel (0) target = $region13
  $region12: #{_actor_forward_impl.1} parent=0 // pred_region
    _
  $region13: #{_actor_forward_impl.1} parent=0 // pred_fallthru
    _
  // Predicated region
  $region14: #{_actor_forward_impl.1} parent=0 // pred_check
    _
  $region15: #{_actor_forward_impl.1} parent=0 // pred_check_branch
    %19 = sbr.rel (0) target = $region17
  $region16: #{_actor_forward_impl.1} parent=0 // pred_region
    _
  $region17: #{_actor_forward_impl.1} parent=0 // pred_fallthru
    _
  // Predicated region
  $region18: #{_actor_forward_impl.1} parent=0 // pred_check
    _
  $region19: #{_actor_forward_impl.1} parent=0 // pred_check_branch
    %21 = sbr.rel (0) target = $region21
  $region20: #{_actor_forward_impl.1} parent=0 // pred_region
    _
  $region21: #{_actor_forward_impl.1} parent=0 // pred_fallthru
    _
  // Predicated region
  $region22: #{_actor_forward_impl.1} parent=0 // pred_check
    _
  $region23: #{_actor_forward_impl.1} parent=0 // pred_check_branch
    %23 = sbr.rel (0) target = $region25
  $region24: #{_actor_forward_impl.1} parent=0 // pred_region
    _
  $region25: #{_actor_forward_impl.1} parent=0 // pred_fallthru
    _
  // Predicated region
  $region26: #{_actor_forward_impl.1} parent=0 // pred_check
    _
  $region27: #{_actor_forward_impl.1} parent=0 // pred_check_branch
    %25 = sbr.rel (0) target = $region29
  $region28: #{_actor_forward_impl.1} parent=0 // pred_region
    _
  $region29: #{_actor_forward_impl.1} parent=0 // pred_fallthru
    _
  %v26 = vld [vmem:[%s0] sm:$0xff]
  %v27 = vld [vmem:[%s0 + $0x8] sm:$0xff]
  %v28 = vld [vmem:[%s1] sm:$0xff]
  %v29 = vld [vmem:[%s1 + $0x8] sm:$0xff]
  %v30 = vld [vmem:[%s1 + $0x10] sm:$0xff]
  %v31 = vld [vmem:[%s1 + $0x18] sm:$0xff]
  %v32 = vld [vmem:[%s2] sm:$0xff]
  %v33 = vld [vmem:[%s2 + $0x8] sm:$0xff]
  %v34 = vld [vmem:[%s2 + $0x10] sm:$0xff]
  %v35 = vld [vmem:[%s2 + $0x18] sm:$0xff]
  %37 = vset.pattern.permute.xlu0 0
  %38 = vperm.xlu0 %37, %v32
  %v39 = vpop.permute.xlu0 %38
  %42 = vset.pattern.permute.xlu0 0
  %43 = vperm.xlu0 %42, %v33
  %v44 = vpop.permute.xlu0 %43
  %47 = vset.pattern.permute.xlu0 0
  %48 = vperm.xlu0 %47, %v34
  %v49 = vpop.permute.xlu0 %48
  %52 = vset.pattern.permute.xlu0 0
  %53 = vperm.xlu0 %52, %v35
  %v54 = vpop.permute.xlu0 %53
  %vm56 = vcmask 130048
  %v58 = vsel %vm56, %v28, 0
  %v61 = vsel %vm56, %v29, 0
  %v64 = vsel %vm56, %v30, 0
  %v67 = vsel %vm56, %v31, 0
  %69 = vmatprep.subr.mxu0 0.0
  %70 = vmatpush1.msra.mxu0 0.0
  %71 = vmatprep.subr.mxu0 0.0
  %72 = vmatpush1.msra.mxu0 0.0
  %73 = vmatprep.subr.mxu0 0.0
  %74 = vmatpush1.msra.mxu0 0.0
  %75 = vmatprep.subr.mxu0 0.0
  %76 = vmatpush1.msra.mxu0 0.0
  %77 = vmatprep.subr.mxu0 0.0
  %78 = vmatpush1.msra.mxu0 0.0
  %79 = vmatprep.subr.mxu0 0.0
  %80 = vmatpush1.msra.mxu0 0.0
  %81 = vmatprep.subr.mxu0 0.0
  %82 = vmatpush1.msra.mxu0 0.0
  %83 = vmatprep.subr.mxu0 0.0
  %84 = vmatpush1.msra.mxu0 0.0
  %85 = vmatprep.subr.mxu0 0.0
  %86 = vmatpush1.msra.mxu0 0.0
  %87 = vmatprep.subr.mxu0 0.0
  %88 = vmatpush1.msra.mxu0 0.0
  %89 = vmatprep.subr.mxu0 0.0
  %90 = vmatpush1.msra.mxu0 0.0
  %91 = vmatprep.subr.mxu0 0.0
  %92 = vmatpush1.msra.mxu0 0.0
  %93 = vmatprep.subr.mxu0 0.0
  %94 = vmatpush1.msra.mxu0 0.0
  %95 = vmatprep.subr.mxu0 0.0
  %96 = vmatpush1.msra.mxu0 0.0
  %97 = vmatprep.subr.mxu0 0.0
  %98 = vmatpush1.msra.mxu0 %v27
  %99 = vmatprep.subr.mxu0 0.0
  %100 = vmatpush1.msra.mxu0 %v26
  %101 = vmatprep.subr.mxu0 0.0
  %102 = vmatpush2.msra.mxu0 0.0
  %103 = vmatprep.subr.mxu0 0.0
  %104 = vmatpush2.msra.mxu0 0.0
  %105 = vmatprep.subr.mxu0 0.0
  %106 = vmatpush2.msra.mxu0 0.0
  %107 = vmatprep.subr.mxu0 0.0
  %108 = vmatpush2.msra.mxu0 0.0
  %109 = vmatprep.subr.mxu0 0.0
  %110 = vmatpush2.msra.mxu0 0.0
  %111 = vmatprep.subr.mxu0 0.0
  %112 = vmatpush2.msra.mxu0 0.0
  %113 = vmatprep.subr.mxu0 0.0
  %114 = vmatpush2.msra.mxu0 0.0
  %115 = vmatprep.subr.mxu0 0.0
  %116 = vmatpush2.msra.mxu0 0.0
  %117 = vmatprep.subr.mxu0 0.0
  %118 = vmatpush2.msra.mxu0 0.0
  %119 = vmatprep.subr.mxu0 0.0
  %120 = vmatpush2.msra.mxu0 0.0
  %121 = vmatprep.subr.mxu0 0.0
  %122 = vmatpush2.msra.mxu0 0.0
  %123 = vmatprep.subr.mxu0 0.0
  %124 = vmatpush2.msra.mxu0 0.0
  %125 = vmatprep.subr.mxu0 0.0
  %126 = vmatpush2.msra.mxu0 0.0
  %127 = vmatprep.subr.mxu0 0.0
  %128 = vmatpush2.msra.mxu0 0.0
  %129 = vmatprep.subr.mxu0 0.0
  %130 = vmatpush2.msra.mxu0 0.0
  %131 = vmatprep.subr.mxu0 0.0
  %132 = vmatpush2.msra.mxu0 0.0
  %133 = vmatprep.mubr.f32.mxu0 0.0
  %134 = vmatmul.mubr.f32.gmra.mxu0 %v58
  %v135 = vpop.f32.mrf.mxu0
  %v136 = vadd.f32 %v39, %v135
  %v137 = vpop.f32.mrf.mxu0
  %138 = vmatprep.mubr.f32.mxu0 0.0
  %139 = vmatmul.mubr.f32.gmra.mxu0 %v61
  %v140 = vpop.f32.mrf.mxu0
  %v141 = vadd.f32 %v44, %v140
  %v142 = vpop.f32.mrf.mxu0
  %143 = vmatprep.mubr.f32.mxu0 0.0
  %144 = vmatmul.mubr.f32.gmra.mxu0 %v64
  %v145 = vpop.f32.mrf.mxu0
  %v146 = vadd.f32 %v49, %v145
  %v147 = vpop.f32.mrf.mxu0
  %148 = vmatprep.mubr.f32.mxu0 0.0
  %149 = vmatmul.mubr.f32.gmra.mxu0 %v67
  %v150 = vpop.f32.mrf.mxu0
  %v151 = vadd.f32 %v54, %v150
  %v152 = vpop.f32.mrf.mxu0
  %153 = vdwg.mxu0
  %v154 = vmax.f32 %v136, 0.0
  %v155 = vmax.f32 %v141, 0.0
  %v156 = vmax.f32 %v146, 0.0
  %v157 = vmax.f32 %v151, 0.0
  %v158 = vld [vmem:[%s3] sm:$0xff]
  %v159 = vld [vmem:[%s3 + $0x8] sm:$0xff]
  %v160 = vld [vmem:[%s3 + $0x10] sm:$0xff]
  %v161 = vld [vmem:[%s3 + $0x18] sm:$0xff]
  %v162 = vld [vmem:[%s4] sm:$0xff]
  %v163 = vld [vmem:[%s4 + $0x8] sm:$0xff]
  %v164 = vld [vmem:[%s4 + $0x10] sm:$0xff]
  %v165 = vld [vmem:[%s4 + $0x18] sm:$0xff]
  %167 = vset.pattern.permute.xlu0 0
  %168 = vperm.xlu0 %167, %v162
  %v169 = vpop.permute.xlu0 %168
  %172 = vset.pattern.permute.xlu0 0
  %173 = vperm.xlu0 %172, %v163
  %v174 = vpop.permute.xlu0 %173
  %177 = vset.pattern.permute.xlu0 0
  %178 = vperm.xlu0 %177, %v164
  %v179 = vpop.permute.xlu0 %178
  %182 = vset.pattern.permute.xlu0 0
  %183 = vperm.xlu0 %182, %v165
  %v184 = vpop.permute.xlu0 %183
  %vm186 = vcmask 261120
  %v188 = vsel %vm186, %v158, 0
  %v191 = vsel %vm186, %v159, 0
  %v194 = vsel %vm186, %v160, 0
  %v197 = vsel %vm186, %v161, 0
  %199 = vmatprep.subr.mxu0 0.0
  %200 = vmatpush1.msra.mxu0 0.0
  %201 = vmatprep.subr.mxu0 0.0
  %202 = vmatpush1.msra.mxu0 0.0
  %203 = vmatprep.subr.mxu0 0.0
  %204 = vmatpush1.msra.mxu0 0.0
  %205 = vmatprep.subr.mxu0 0.0
  %206 = vmatpush1.msra.mxu0 0.0
  %207 = vmatprep.subr.mxu0 0.0
  %208 = vmatpush1.msra.mxu0 0.0
  %209 = vmatprep.subr.mxu0 0.0
  %210 = vmatpush1.msra.mxu0 0.0
  %211 = vmatprep.subr.mxu0 0.0
  %212 = vmatpush1.msra.mxu0 0.0
  %213 = vmatprep.subr.mxu0 0.0
  %214 = vmatpush1.msra.mxu0 0.0
  %215 = vmatprep.subr.mxu0 0.0
  %216 = vmatpush1.msra.mxu0 0.0
  %217 = vmatprep.subr.mxu0 0.0
  %218 = vmatpush1.msra.mxu0 0.0
  %219 = vmatprep.subr.mxu0 0.0
  %220 = vmatpush1.msra.mxu0 0.0
  %221 = vmatprep.subr.mxu0 0.0
  %222 = vmatpush1.msra.mxu0 0.0
  %223 = vmatprep.subr.mxu0 0.0
  %224 = vmatpush1.msra.mxu0 %v157
  %225 = vmatprep.subr.mxu0 0.0
  %226 = vmatpush1.msra.mxu0 %v156
  %227 = vmatprep.subr.mxu0 0.0
  %228 = vmatpush1.msra.mxu0 %v155
  %229 = vmatprep.subr.mxu0 0.0
  %230 = vmatpush1.msra.mxu0 %v154
  %231 = vmatprep.subr.mxu0 0.0
  %232 = vmatpush2.msra.mxu0 0.0
  %233 = vmatprep.subr.mxu0 0.0
  %234 = vmatpush2.msra.mxu0 0.0
  %235 = vmatprep.subr.mxu0 0.0
  %236 = vmatpush2.msra.mxu0 0.0
  %237 = vmatprep.subr.mxu0 0.0
  %238 = vmatpush2.msra.mxu0 0.0
  %239 = vmatprep.subr.mxu0 0.0
  %240 = vmatpush2.msra.mxu0 0.0
  %241 = vmatprep.subr.mxu0 0.0
  %242 = vmatpush2.msra.mxu0 0.0
  %243 = vmatprep.subr.mxu0 0.0
  %244 = vmatpush2.msra.mxu0 0.0
  %245 = vmatprep.subr.mxu0 0.0
  %246 = vmatpush2.msra.mxu0 0.0
  %247 = vmatprep.subr.mxu0 0.0
  %248 = vmatpush2.msra.mxu0 0.0
  %249 = vmatprep.subr.mxu0 0.0
  %250 = vmatpush2.msra.mxu0 0.0
  %251 = vmatprep.subr.mxu0 0.0
  %252 = vmatpush2.msra.mxu0 0.0
  %253 = vmatprep.subr.mxu0 0.0
  %254 = vmatpush2.msra.mxu0 0.0
  %255 = vmatprep.subr.mxu0 0.0
  %256 = vmatpush2.msra.mxu0 0.0
  %257 = vmatprep.subr.mxu0 0.0
  %258 = vmatpush2.msra.mxu0 0.0
  %259 = vmatprep.subr.mxu0 0.0
  %260 = vmatpush2.msra.mxu0 0.0
  %261 = vmatprep.subr.mxu0 0.0
  %262 = vmatpush2.msra.mxu0 0.0
  %263 = vmatprep.mubr.f32.mxu0 0.0
  %264 = vmatmul.mubr.f32.gmra.mxu0 %v188
  %v265 = vpop.f32.mrf.mxu0
  %v266 = vadd.f32 %v169, %v265
  %v267 = vpop.f32.mrf.mxu0
  %268 = vmatprep.mubr.f32.mxu0 0.0
  %269 = vmatmul.mubr.f32.gmra.mxu0 %v191
  %v270 = vpop.f32.mrf.mxu0
  %v271 = vadd.f32 %v174, %v270
  %v272 = vpop.f32.mrf.mxu0
  %273 = vmatprep.mubr.f32.mxu0 0.0
  %274 = vmatmul.mubr.f32.gmra.mxu0 %v194
  %v275 = vpop.f32.mrf.mxu0
  %v276 = vadd.f32 %v179, %v275
  %v277 = vpop.f32.mrf.mxu0
  %278 = vmatprep.mubr.f32.mxu0 0.0
  %279 = vmatmul.mubr.f32.gmra.mxu0 %v197
  %v280 = vpop.f32.mrf.mxu0
  %v281 = vadd.f32 %v184, %v280
  %v282 = vpop.f32.mrf.mxu0
  %283 = vdwg.mxu0
  %v284 = vmax.f32 %v266, 0.0
  %v285 = vmax.f32 %v271, 0.0
  %v286 = vmax.f32 %v276, 0.0
  %v287 = vmax.f32 %v281, 0.0
  %v288 = vld [vmem:[%s5] sm:$0xff]
  %v289 = vld [vmem:[%s6] sm:$0xff]
  %291 = vset.pattern.permute.xlu0 0
  %292 = vperm.xlu0 %291, %v289
  %v293 = vpop.permute.xlu0 %292
  %v296 = vsel %vm186, %v288, 0
  %298 = vmatprep.subr.mxu0 0.0
  %299 = vmatpush1.msra.mxu0 0.0
  %300 = vmatprep.subr.mxu0 0.0
  %301 = vmatpush1.msra.mxu0 0.0
  %302 = vmatprep.subr.mxu0 0.0
  %303 = vmatpush1.msra.mxu0 0.0
  %304 = vmatprep.subr.mxu0 0.0
  %305 = vmatpush1.msra.mxu0 0.0
  %306 = vmatprep.subr.mxu0 0.0
  %307 = vmatpush1.msra.mxu0 0.0
  %308 = vmatprep.subr.mxu0 0.0
  %309 = vmatpush1.msra.mxu0 0.0
  %310 = vmatprep.subr.mxu0 0.0
  %311 = vmatpush1.msra.mxu0 0.0
  %312 = vmatprep.subr.mxu0 0.0
  %313 = vmatpush1.msra.mxu0 0.0
  %314 = vmatprep.subr.mxu0 0.0
  %315 = vmatpush1.msra.mxu0 0.0
  %316 = vmatprep.subr.mxu0 0.0
  %317 = vmatpush1.msra.mxu0 0.0
  %318 = vmatprep.subr.mxu0 0.0
  %319 = vmatpush1.msra.mxu0 0.0
  %320 = vmatprep.subr.mxu0 0.0
  %321 = vmatpush1.msra.mxu0 0.0
  %322 = vmatprep.subr.mxu0 0.0
  %323 = vmatpush1.msra.mxu0 %v287
  %324 = vmatprep.subr.mxu0 0.0
  %325 = vmatpush1.msra.mxu0 %v286
  %326 = vmatprep.subr.mxu0 0.0
  %327 = vmatpush1.msra.mxu0 %v285
  %328 = vmatprep.subr.mxu0 0.0
  %329 = vmatpush1.msra.mxu0 %v284
  %330 = vmatprep.subr.mxu0 0.0
  %331 = vmatpush2.msra.mxu0 0.0
  %332 = vmatprep.subr.mxu0 0.0
  %333 = vmatpush2.msra.mxu0 0.0
  %334 = vmatprep.subr.mxu0 0.0
  %335 = vmatpush2.msra.mxu0 0.0
  %336 = vmatprep.subr.mxu0 0.0
  %337 = vmatpush2.msra.mxu0 0.0
  %338 = vmatprep.subr.mxu0 0.0
  %339 = vmatpush2.msra.mxu0 0.0
  %340 = vmatprep.subr.mxu0 0.0
  %341 = vmatpush2.msra.mxu0 0.0
  %342 = vmatprep.subr.mxu0 0.0
  %343 = vmatpush2.msra.mxu0 0.0
  %344 = vmatprep.subr.mxu0 0.0
  %345 = vmatpush2.msra.mxu0 0.0
  %346 = vmatprep.subr.mxu0 0.0
  %347 = vmatpush2.msra.mxu0 0.0
  %348 = vmatprep.subr.mxu0 0.0
  %349 = vmatpush2.msra.mxu0 0.0
  %350 = vmatprep.subr.mxu0 0.0
  %351 = vmatpush2.msra.mxu0 0.0
  %352 = vmatprep.subr.mxu0 0.0
  %353 = vmatpush2.msra.mxu0 0.0
  %354 = vmatprep.subr.mxu0 0.0
  %355 = vmatpush2.msra.mxu0 0.0
  %356 = vmatprep.subr.mxu0 0.0
  %357 = vmatpush2.msra.mxu0 0.0
  %358 = vmatprep.subr.mxu0 0.0
  %359 = vmatpush2.msra.mxu0 0.0
  %360 = vmatprep.subr.mxu0 0.0
  %361 = vmatpush2.msra.mxu0 0.0
  %362 = vmatprep.mubr.f32.mxu0 0.0
  %363 = vmatmul.mubr.f32.gmra.mxu0 %v296
  %v364 = vpop.f32.mrf.mxu0
  %v365 = vadd.f32 %v293, %v364
  %v366 = vpop.f32.mrf.mxu0
  %367 = vdwg.mxu0
  %v368 = vtanh.pop %v365
  %v369 = vmax.f32 %v365, 0.0
  %v370 = vand.u32 2147483647, %v365
  %v371 = vsub.f32 0.0, %v370
  %v372 = vmul.f32 %v371, 1.442695
  %v373 = vpow.pop %v372
  %v374 = vadd.f32 %v373, 1.0
  %v375 = vlog2.pop %v374
  %v376 = vmul.f32 %v375, 0.6931472
  %v377 = vmul.f32 -0.5, %v373
  %v378 = vadd.f32 %v377, 1.0
  %v379 = vmul.f32 %v378, %v373
  %v380 = vand.u32 2147483647, %v373
  %vm381 = vcmp.lt.f32.partialorder %v380, 0.0004427343
  %v382 = vsel %vm381, %v379, %v376
  %v383 = vadd.f32 %v369, %v382
  %v384 = vadd.f32 %v383, 0.0001
  %v385 = vlaneseq
  %v386 = vshrl.u32 %v385, 7
  %vm387 = vcmp.lt.s32.totalorder %v386, 4
  %v388 = vsel %vm387, %v368, %v384
  %389 = vst [vmem:[%s7] sm:$0xff] %v388
  // Predicated region
  $region30: #{_actor_forward_impl.1} parent=0 // pred_check
    _
  $region31: #{_actor_forward_impl.1} parent=0 // pred_check_branch
    %391 = sbr.rel (0) target = $region33
  $region32: #{_actor_forward_impl.1} parent=0 // pred_region
    _
  $region33: #{_actor_forward_impl.1} parent=0 // pred_fallthru
    _
  // Predicated region
  $region34: #{_actor_forward_impl.1} parent=0 // pred_check
    _
  $region35: #{_actor_forward_impl.1} parent=0 // pred_check_branch
    %393 = sbr.rel (0) target = $region37
  $region36: #{_actor_forward_impl.1} parent=0 // pred_region
    _
  $region37: #{_actor_forward_impl.1} parent=0 // pred_fallthru
    _

</llo_original>
